<compile_context>
chip_gen: v5e
topology: v5e:2x2
jax: 0.10.0
libtpu: 0.0.40
codegen_flags: <defaults>
</compile_context>

<pallas_src>
import functools

import jax
import jax.numpy as jnp
from jax.experimental import pallas as pl
from jax.experimental.pallas import tpu as pltpu


def _pim_lstm_kernel(x_ref, h_ref, w_ref, b_ref, o_ref, *, compute_dtype):
    # Pack [x | h] along the contraction axis in registers (lane concat of
    # lane-aligned tiles = layout plumbing only) so a single MXU pass does
    # the whole K = in_f + out_f contraction with f32 accumulation.
    xh = jnp.concatenate(
        [x_ref[...].astype(compute_dtype), h_ref[...].astype(compute_dtype)],
        axis=1,
    )
    acc = jnp.dot(xh, w_ref[...], preferred_element_type=jnp.float32)
    # Bias add on the VPU and tanh on the EUP, both in f32, then cast.
    o_ref[...] = jnp.tanh(acc + b_ref[...]).astype(o_ref.dtype)


def pim_lstm_forward(x, h, input_weight, hidden_weight, bias,
                     compute_dtype=jnp.float32):
    """x: (B, in_f), h: (B, out_f), input_weight: (in_f, out_f),
    hidden_weight: (out_f, out_f), bias: (out_f,) -> (B, out_f)."""
    B, in_f = x.shape
    out_f = hidden_weight.shape[-1]
    assert h.shape == (B, out_f)
    assert input_weight.shape == (in_f, out_f)
    assert hidden_weight.shape == (out_f, out_f)

    bias2d = jnp.asarray(bias, jnp.float32).reshape(1, out_f)

    # One-time weight stack along the contraction axis (ideally cached by the
    # caller across recurrent steps): (in_f + out_f, out_f).
    w_stacked = jnp.concatenate(
        [input_weight, hidden_weight], axis=0).astype(compute_dtype)

    vmem = lambda: pl.BlockSpec(memory_space=pltpu.MemorySpace.VMEM)
    kernel = functools.partial(_pim_lstm_kernel, compute_dtype=compute_dtype)

    # Small problem: single-block kernel, whole operands resident in VMEM.
    # TODO(synk): in a recurrent driver that donates h, alias the hidden
    # state via input_output_aliases={1: 0} to skip the output allocation.
    return pl.pallas_call(
        kernel,
        out_shape=jax.ShapeDtypeStruct((B, out_f), x.dtype),
        in_specs=[vmem(), vmem(), vmem(), vmem()],
        out_specs=vmem(),
    )(x, h, w_stacked, bias2d)


def pim_lstm_reference(x, h, input_weight, hidden_weight, bias,
                       dtype=jnp.float32):
    xh = jnp.concatenate([x, h], axis=1).astype(dtype)
    w = jnp.concatenate([input_weight, hidden_weight], axis=0).astype(dtype)
    gate = jnp.dot(xh, w, preferred_element_type=jnp.float32)
    return jnp.tanh(gate + bias.reshape(1, -1).astype(jnp.float32))


if __name__ == "__main__":
    # Small shapes consistent with the module: batch=8, in=128, out=128.
    B, IN_F, OUT_F = 8, 128, 128
    key = jax.random.PRNGKey(0)
    k_x, k_h, k_wi, k_wh, k_b = jax.random.split(key, 5)

    # Deterministic "torch.randn"-style parameter init, done in-script.
    input_weight = jax.random.normal(k_wi, (IN_F, OUT_F), dtype=jnp.float32)
    hidden_weight = jax.random.normal(k_wh, (OUT_F, OUT_F), dtype=jnp.float32)
    bias = jax.random.normal(k_b, (OUT_F,), dtype=jnp.float32)

    x = jax.random.normal(k_x, (B, IN_F), dtype=jnp.float32)
    h = jax.random.normal(k_h, (B, OUT_F), dtype=jnp.float32)

    # f32 path (default): matches the module's forward semantics.
    out_f32 = jax.block_until_ready(
        pim_lstm_forward(x, h, input_weight, hidden_weight, bias))
    ref_f32 = pim_lstm_reference(x, h, input_weight, hidden_weight, bias)
    assert out_f32.shape == (B, OUT_F)
    assert jnp.allclose(out_f32, ref_f32, atol=1e-4, rtol=1e-4), "f32 mismatch"

    # bf16 MXU path (for when shapes / sequence length scale); compared
    # against a bf16 reference computed the same way.
    out_bf16 = jax.block_until_ready(
        pim_lstm_forward(x, h, input_weight, hidden_weight, bias,
                         compute_dtype=jnp.bfloat16))
    ref_bf16 = pim_lstm_reference(x, h, input_weight, hidden_weight, bias,
                                  dtype=jnp.bfloat16)
    assert jnp.allclose(out_bf16, ref_bf16, atol=5e-2, rtol=5e-2), "bf16 mismatch"

    print("KERNEL_OK")
</pallas_src>

<mosaic_0001>
module attributes {stable_mosaic.version = 11 : i64} {
  func.func @_pim_lstm_kernel(%arg0: memref<8x128xf32, #tpu.memory_space<vmem>>, %arg1: memref<8x128xf32, #tpu.memory_space<vmem>>, %arg2: memref<256x128xf32, #tpu.memory_space<vmem>>, %arg3: memref<1x128xf32, #tpu.memory_space<vmem>>, %arg4: memref<8x128xf32, #tpu.memory_space<vmem>>) attributes {dimension_semantics = [], scalar_prefetch = 0 : i64, scratch_operands = 0 : i64, tpu.core_type = #tpu.core_type<tc>} {
    %c0 = arith.constant 0 : index
    %c0_0 = arith.constant 0 : index
    %0 = vector.load %arg0[%c0, %c0_0] : memref<8x128xf32, #tpu.memory_space<vmem>>, vector<8x128xf32>
    %c0_1 = arith.constant 0 : index
    %c0_2 = arith.constant 0 : index
    %1 = vector.load %arg1[%c0_1, %c0_2] : memref<8x128xf32, #tpu.memory_space<vmem>>, vector<8x128xf32>
    %2 = tpu.concatenate %0, %1 in 1 : vector<8x128xf32>, vector<8x128xf32> -> vector<8x256xf32>
    %c0_3 = arith.constant 0 : index
    %c0_4 = arith.constant 0 : index
    %3 = vector.load %arg2[%c0_3, %c0_4] : memref<256x128xf32, #tpu.memory_space<vmem>>, vector<256x128xf32>
    %cst = arith.constant dense<0.000000e+00> : vector<8x128xf32>
    %4 = tpu.matmul %2, %3, %cst {dimension_numbers = #tpu.dot_dimension_numbers<[1], [0], [0], [1], [0, 0, 1, 1], [], []>} : vector<8x256xf32>, vector<256x128xf32>, vector<8x128xf32> -> vector<8x128xf32>
    %c0_5 = arith.constant 0 : index
    %c0_6 = arith.constant 0 : index
    %5 = vector.load %arg3[%c0_5, %c0_6] : memref<1x128xf32, #tpu.memory_space<vmem>>, vector<1x128xf32>
    %6 = vector.broadcast %5 : vector<1x128xf32> to vector<8x128xf32>
    %7 = arith.addf %4, %6 : vector<8x128xf32>
    %8 = math.tanh %7 : vector<8x128xf32>
    %c0_7 = arith.constant 0 : index
    %c0_8 = arith.constant 0 : index
    %9 = vector.load %arg4[%c0_7, %c0_8] : memref<8x128xf32, #tpu.memory_space<vmem>>, vector<8x128xf32>
    tpu.vector_store %arg4[%c0_7, %c0_8], %8 {strides = array<i32>} : memref<8x128xf32, #tpu.memory_space<vmem>>, vector<8x128xf32>,
    return
  }
}

</mosaic_0001>

<llo_original>
// kernel: tpu_custom_call.1
$region0: #{tpu_custom_call.1}
  #allocation0 [shape = 'u32[]', space=smem, size = 0x4, offset = 0x4, fixed_abs, tag = 'smem constant byte address 0x4 - core index']
  #allocation1 [shape = 'u32[72,128]{1,0:T(1,128)}', space=vmem, size = 0x9000, scoped, tag = 'internal scratch']
  %s0 = inlined_call_operand.hbm [shape: f32[8,128], index: 0, kind: input, shape index: {}]
  %s1 = inlined_call_operand.hbm [shape: f32[8,128], index: 1, kind: input, shape index: {}]
  %s2 = inlined_call_operand.hbm [shape: f32[256,128], index: 2, kind: input, shape index: {}]
  %s3 = inlined_call_operand.vmem [shape: f32[1,128], index: 3, kind: input, shape index: {}]
  %s4 = inlined_call_operand.hbm [shape: f32[8,128], index: 4, kind: output, shape index: {}]
  %s5 = sld [smem:[#allocation0]]
  $region38: #{tpu_custom_call.1} parent=0
    _
  %s7 = ssub.s32 1, %s5
  %s8 = scalar_select 0, %s7, %s5
  $region1: #{tpu_custom_call.1} parent=0
    #allocation2 [shape = 'u8[4096]{0}', space=vmem, size = 0x1000, scoped, tag = 'input window, operand 0, single buffered']
    #allocation3 [shape = 's32[1]{0}', space=sflag, size = 0x4, scoped, tag = 'scoped memory for tpu_custom_call.1']
    #allocation4 [shape = 's32[1]{0}', space=sflag, size = 0x4, scoped, tag = 'scoped memory for tpu_custom_call.1']
    #allocation5 [shape = 'u8[4096]{0}', space=vmem, size = 0x1000, scoped, tag = 'input window, operand 1, single buffered']
    #allocation6 [shape = 's32[1]{0}', space=sflag, size = 0x4, scoped, tag = 'scoped memory for tpu_custom_call.1']
    #allocation7 [shape = 'u8[131072]{0}', space=vmem, size = 0x20000, scoped, tag = 'input window, operand 2, single buffered']
    #allocation8 [shape = 'u8[4096]{0}', space=vmem, size = 0x1000, scoped, tag = 'output window, operand 0, single buffered']
    %9 = vsyncpa [#allocation3], 0
    %10 = vsyncpa [#allocation6], 0
    %11 = vsyncpa [#allocation4], 0
    // Predicated region
    $region2: #{tpu_custom_call.1} parent=1 // pred_check
      _
    $region3: #{tpu_custom_call.1} parent=1 // pred_check_branch
      %13 = sbr.rel (0) target = $region5
    $region4: #{tpu_custom_call.1} parent=1 // pred_region
      %15 = vsyncadd [#allocation3], 0
      %s17 = sshll.u32 %s0, 4
      %s18 = int_to_ptr.hbm [resolvable:$true] %s17
      %s19 = sshll.u32 [#allocation2], 4
      %s20 = int_to_ptr.vmem [resolvable:$true] %s19
      %22 = dma.hbm_to_vmem [thread:$0]  %s18, 128, %s20, [#allocation3]
    $region5: #{tpu_custom_call.1} parent=1 // pred_fallthru
      _
    // Predicated region
    $region6: #{tpu_custom_call.1} parent=1 // pred_check
      _
    $region7: #{tpu_custom_call.1} parent=1 // pred_check_branch
      %24 = sbr.rel (0) target = $region9
    $region8: #{tpu_custom_call.1} parent=1 // pred_region
      %26 = vsyncadd [#allocation6], 0
      %s28 = sshll.u32 %s1, 4
      %s29 = int_to_ptr.hbm [resolvable:$true] %s28
      %s30 = sshll.u32 [#allocation5], 4
      %s31 = int_to_ptr.vmem [resolvable:$true] %s30
      %33 = dma.hbm_to_vmem [thread:$0]  %s29, 128, %s31, [#allocation6]
    $region9: #{tpu_custom_call.1} parent=1 // pred_fallthru
      _
    // Predicated region
    $region10: #{tpu_custom_call.1} parent=1 // pred_check
      _
    $region11: #{tpu_custom_call.1} parent=1 // pred_check_branch
      %35 = sbr.rel (0) target = $region13
    $region12: #{tpu_custom_call.1} parent=1 // pred_region
      %37 = vsyncadd [#allocation6], 0
      %s38 = sshll.u32 %s2, 4
      %s39 = int_to_ptr.hbm [resolvable:$true] %s38
      %s40 = sshll.u32 [#allocation7], 4
      %s41 = int_to_ptr.vmem [resolvable:$true] %s40
      %46 = dma.hbm_to_vmem [thread:$0]  %s39, 4096, %s41, [#allocation6], 128, 128, 8
    $region13: #{tpu_custom_call.1} parent=1 // pred_fallthru
      _
    // Predicated region
    $region14: #{tpu_custom_call.1} parent=1 // pred_check
      _
    $region15: #{tpu_custom_call.1} parent=1 // pred_check_branch
      %48 = sbr.rel (0) target = $region17
    $region16: #{tpu_custom_call.1} parent=1 // pred_region
      _
    $region17: #{tpu_custom_call.1} parent=1 // pred_fallthru
      _
    // Predicated region
    $region18: #{tpu_custom_call.1} parent=1 // pred_check
      _
    $region19: #{tpu_custom_call.1} parent=1 // pred_check_branch
      %50 = sbr.rel (0) target = $region21
    $region20: #{tpu_custom_call.1} parent=1 // pred_region
      %52 = dma.done [#allocation3], 128
    $region21: #{tpu_custom_call.1} parent=1 // pred_fallthru
      _
    // Predicated region
    $region22: #{tpu_custom_call.1} parent=1 // pred_check
      _
    $region23: #{tpu_custom_call.1} parent=1 // pred_check_branch
      %54 = sbr.rel (0) target = $region25
    $region24: #{tpu_custom_call.1} parent=1 // pred_region
      %56 = dma.done [#allocation6], 128
    $region25: #{tpu_custom_call.1} parent=1 // pred_fallthru
      _
    // Predicated region
    $region26: #{tpu_custom_call.1} parent=1 // pred_check
      _
    $region27: #{tpu_custom_call.1} parent=1 // pred_check_branch
      %58 = sbr.rel (0) target = $region29
    $region28: #{tpu_custom_call.1} parent=1 // pred_region
      %60 = dma.done [#allocation6], 4096
    $region29: #{tpu_custom_call.1} parent=1 // pred_fallthru
      _
    %v61 = vld [vmem:[#allocation2] sm:$0xff]
    %v62 = vld [vmem:[#allocation5] sm:$0xff]
    %v63 = vld [vmem:[#allocation7] sm:$0xff]
    %v64 = vld [vmem:[#allocation7 + $0x8] sm:$0xff]
    %v65 = vld [vmem:[#allocation7 + $0x10] sm:$0xff]
    %v66 = vld [vmem:[#allocation7 + $0x18] sm:$0xff]
    %v67 = vld [vmem:[#allocation7 + $0x20] sm:$0xff]
    %v68 = vld [vmem:[#allocation7 + $0x28] sm:$0xff]
    %v69 = vld [vmem:[#allocation7 + $0x30] sm:$0xff]
    %v70 = vld [vmem:[#allocation7 + $0x38] sm:$0xff]
    %v71 = vld [vmem:[#allocation7 + $0x40] sm:$0xff]
    %v72 = vld [vmem:[#allocation7 + $0x48] sm:$0xff]
    %v73 = vld [vmem:[#allocation7 + $0x50] sm:$0xff]
    %v74 = vld [vmem:[#allocation7 + $0x58] sm:$0xff]
    %v75 = vld [vmem:[#allocation7 + $0x60] sm:$0xff]
    %v76 = vld [vmem:[#allocation7 + $0x68] sm:$0xff]
    %v77 = vld [vmem:[#allocation7 + $0x70] sm:$0xff]
    %v78 = vld [vmem:[#allocation7 + $0x78] sm:$0xff]
    %v79 = vld [vmem:[#allocation7 + $0x80] sm:$0xff]
    %v80 = vld [vmem:[#allocation7 + $0x88] sm:$0xff]
    %v81 = vld [vmem:[#allocation7 + $0x90] sm:$0xff]
    %v82 = vld [vmem:[#allocation7 + $0x98] sm:$0xff]
    %v83 = vld [vmem:[#allocation7 + $0xa0] sm:$0xff]
    %v84 = vld [vmem:[#allocation7 + $0xa8] sm:$0xff]
    %v85 = vld [vmem:[#allocation7 + $0xb0] sm:$0xff]
    %v86 = vld [vmem:[#allocation7 + $0xb8] sm:$0xff]
    %v87 = vld [vmem:[#allocation7 + $0xc0] sm:$0xff]
    %v88 = vld [vmem:[#allocation7 + $0xc8] sm:$0xff]
    %v89 = vld [vmem:[#allocation7 + $0xd0] sm:$0xff]
    %v90 = vld [vmem:[#allocation7 + $0xd8] sm:$0xff]
    %v91 = vld [vmem:[#allocation7 + $0xe0] sm:$0xff]
    %v92 = vld [vmem:[#allocation7 + $0xe8] sm:$0xff]
    %v93 = vld [vmem:[#allocation7 + $0xf0] sm:$0xff]
    %v94 = vld [vmem:[#allocation7 + $0xf8] sm:$0xff]
    %v95 = vld [vmem:[%s3] sm:$0x1]
    %v97 = vperm.slane %v95, 0
    %99 = vmatpush.msra.mxu0 %v78
    %100 = vmatpush.msra.mxu0 %v77
    %101 = vmatpush.msra.mxu0 %v76
    %102 = vmatpush.msra.mxu0 %v75
    %103 = vmatpush.msra.mxu0 %v74
    %104 = vmatpush.msra.mxu0 %v73
    %105 = vmatpush.msra.mxu0 %v72
    %106 = vmatpush.msra.mxu0 %v71
    %107 = vmatpush.msra.mxu0 %v70
    %108 = vmatpush.msra.mxu0 %v69
    %109 = vmatpush.msra.mxu0 %v68
    %110 = vmatpush.msra.mxu0 %v67
    %111 = vmatpush.msra.mxu0 %v66
    %112 = vmatpush.msra.mxu0 %v65
    %113 = vmatpush.msra.mxu0 %v64
    %114 = vmatpush.msra.mxu0 %v63
    %115 = vmatmul.f32.gmra.mxu0 %v61
    %v116 = vpop.f32.mrf.mxu0
    %v117 = vadd.f32 %v97, %v116
    %118 = vdwg.mxu0
    %119 = vmatpush.msra.mxu0 %v94
    %120 = vmatpush.msra.mxu0 %v93
    %121 = vmatpush.msra.mxu0 %v92
    %122 = vmatpush.msra.mxu0 %v91
    %123 = vmatpush.msra.mxu0 %v90
    %124 = vmatpush.msra.mxu0 %v89
    %125 = vmatpush.msra.mxu0 %v88
    %126 = vmatpush.msra.mxu0 %v87
    %127 = vmatpush.msra.mxu0 %v86
    %128 = vmatpush.msra.mxu0 %v85
    %129 = vmatpush.msra.mxu0 %v84
    %130 = vmatpush.msra.mxu0 %v83
    %131 = vmatpush.msra.mxu0 %v82
    %132 = vmatpush.msra.mxu0 %v81
    %133 = vmatpush.msra.mxu0 %v80
    %134 = vmatpush.msra.mxu0 %v79
    %135 = vmatmul.f32.gmra.mxu0 %v62
    %v136 = vpop.f32.mrf.mxu0
    %v137 = vadd.f32 %v117, %v136
    %138 = vdwg.mxu0
    %v139 = vtanh.pop %v137
    %140 = vst [vmem:[#allocation8] sm:$0xff] %v139
    // Predicated region
    $region30: #{tpu_custom_call.1} parent=1 // pred_check
      _
    $region31: #{tpu_custom_call.1} parent=1 // pred_check_branch
      %142 = sbr.rel (0) target = $region33
    $region32: #{tpu_custom_call.1} parent=1 // pred_region
      %144 = vsyncadd [#allocation4], 0
      %s146 = sshll.u32 [#allocation8], 4
      %s147 = int_to_ptr.vmem [resolvable:$true] %s146
      %s148 = sshll.u32 %s4, 4
      %s149 = int_to_ptr.hbm [resolvable:$true] %s148
      %151 = dma.vmem_to_hbm [thread:$0]  %s147, 128, %s149, [#allocation4]
    $region33: #{tpu_custom_call.1} parent=1 // pred_fallthru
      _
    // Predicated region
    $region34: #{tpu_custom_call.1} parent=1 // pred_check
      _
    $region35: #{tpu_custom_call.1} parent=1 // pred_check_branch
      %153 = sbr.rel (0) target = $region37
    $region36: #{tpu_custom_call.1} parent=1 // pred_region
      %155 = dma.done [#allocation4], 128
    $region37: #{tpu_custom_call.1} parent=1 // pred_fallthru
      _
    %156 = vsyncpa [#allocation3], 1
    %157 = vsyncpa [#allocation6], 1
    %158 = vsyncpa [#allocation4], 1

</llo_original>
